<compile_context>
chip_gen: v7x
topology: tpu7x:2x2x1
jax: 0.10.0
libtpu: 0.0.40
codegen_flags: <defaults>
</compile_context>

<pallas_src>
import functools
import math

import jax
import jax.numpy as jnp
from jax.experimental import pallas as pl
from jax.experimental.pallas import tpu as pltpu

LANE = 128       # lane width of a vreg
SUBLANE = 8      # f32 sublane count of a vreg
S_GRANULE = 16   # bf16 packs 2 rows/sublane -> pad contraction dims to 16
_SPLIT_MIN_ROWS = 1024   # batches >= this get >= 2 grid steps (megacore)


def _round_up(n, m):
    return ((n + m - 1) // m) * m


def _pad2(a, rows, cols):
    return jnp.pad(a, ((0, rows - a.shape[0]), (0, cols - a.shape[1])))


def qnet_kernel(x_ref,
                w1_ref, b1_ref,
                w2_ref, b2_ref,
                w3_ref, b3_ref,
                wq_ref, bq_ref,
                q_ref):
    """Fused forward on one batch tile: 3x(Linear+ReLU) -> fused V/A head.

    Weights are bf16; activations are cast to bf16 per dot; accumulation and
    bias-add / ReLU are f32.
    """
    bf16 = jnp.bfloat16
    h = jnp.dot(x_ref[...].astype(bf16), w1_ref[...],
                preferred_element_type=jnp.float32) + b1_ref[...]
    h = jnp.maximum(h, 0.0)
    h = jnp.dot(h.astype(bf16), w2_ref[...],
                preferred_element_type=jnp.float32) + b2_ref[...]
    h = jnp.maximum(h, 0.0)
    h = jnp.dot(h.astype(bf16), w3_ref[...],
                preferred_element_type=jnp.float32) + b3_ref[...]
    h = jnp.maximum(h, 0.0)
    # Single fused head matmul: wq = wa + wv (broadcast), bq = ba + bv.
    q = jnp.dot(h.astype(bf16), wq_ref[...],
                preferred_element_type=jnp.float32) + bq_ref[...]
    q_ref[...] = q.astype(q_ref.dtype)


@functools.partial(jax.jit, static_argnames=("tile_b",))
def qnet_forward(x, params, *, tile_b=2048):
    """Fused Pallas QNet forward.  x: (batch, num_states) float32."""
    (w1, b1, w2, b2, w3, b3, wv, bv, wa, ba) = params
    batch, num_states = x.shape
    hidden = w1.shape[1]
    num_actions = wa.shape[1]

    # ---- layout plumbing -------------------------------------------------
    # Feature dim: only pad to the bf16 sublane granule (NOT to 128 lanes);
    # the x/w1 BlockSpecs use the "block dim == full array dim" exception.
    s_pad = _round_up(num_states, S_GRANULE)
    h_pad = _round_up(hidden, LANE)        # hidden=50 -> 128 (lane-dense)
    a_pad = _round_up(num_actions, LANE)   # lane-dense output stores

    # Batch tiling: big tiles for HBM efficiency, but >= 2 grid steps for
    # large batches so both v7x TensorCores get work.
    b8 = _round_up(batch, SUBLANE)
    tb = min(tile_b, b8)
    if tb == b8 and b8 >= _SPLIT_MIN_ROWS:
        tb = _round_up(pl.cdiv(b8, 2), SUBLANE)
    b_pad = _round_up(batch, tb)

    wdt = jnp.bfloat16
    x_p = jnp.pad(x, ((0, b_pad - batch), (0, s_pad - num_states)))
    w1_p = _pad2(w1, s_pad, h_pad).astype(wdt)
    b1_p = _pad2(b1, 1, h_pad)
    w2_p = _pad2(w2, h_pad, h_pad).astype(wdt)
    b2_p = _pad2(b2, 1, h_pad)
    w3_p = _pad2(w3, h_pad, h_pad).astype(wdt)
    b3_p = _pad2(b3, 1, h_pad)
    # Fuse V and A heads (V broadcasts over actions); zero-padding is exact.
    wq_p = _pad2(wa + wv, h_pad, a_pad).astype(wdt)
    bq_p = _pad2(ba + bv, 1, a_pad)

    grid = (b_pad // tb,)

    def tiled(i):        # activation / output tiles stream over the batch grid
        return (i, 0)

    def resident(i):     # weights & biases: same block every step -> stay in VMEM
        return (0, 0)

    q_padded = pl.pallas_call(
        qnet_kernel,
        out_shape=jax.ShapeDtypeStruct((b_pad, a_pad), jnp.float32),
        grid_spec=pltpu.PrefetchScalarGridSpec(
            num_scalar_prefetch=0,
            grid=grid,
            in_specs=[
                pl.BlockSpec((tb, s_pad), tiled),        # x (narrow feature dim)
                pl.BlockSpec((s_pad, h_pad), resident),  # w1 (bf16)
                pl.BlockSpec((1, h_pad), resident),      # b1 (f32)
                pl.BlockSpec((h_pad, h_pad), resident),  # w2
                pl.BlockSpec((1, h_pad), resident),      # b2
                pl.BlockSpec((h_pad, h_pad), resident),  # w3
                pl.BlockSpec((1, h_pad), resident),      # b3
                pl.BlockSpec((h_pad, a_pad), resident),  # fused head weight
                pl.BlockSpec((1, a_pad), resident),      # fused head bias
            ],
            out_specs=pl.BlockSpec((tb, a_pad), tiled),
        ),
        compiler_params=pltpu.CompilerParams(
            dimension_semantics=("parallel",),       # shard batch grid across TCs
            vmem_limit_bytes=32 * 1024 * 1024,       # footprint ~4-6 MiB at tb=2048
        ),
    )(x_p, w1_p, b1_p, w2_p, b2_p, w3_p, b3_p, wq_p, bq_p)

    return q_padded[:batch, :num_actions]


# ---------------------------------------------------------------------------
# Parameter init + references
# ---------------------------------------------------------------------------
def init_linear(key, in_features, out_features):
    """nn.Linear-style init (uniform +/- 1/sqrt(in)); W pre-transposed to
    (in, out), bias as a (1, out) row for clean broadcasting."""
    kw, kb = jax.random.split(key)
    bound = 1.0 / math.sqrt(in_features)
    w = jax.random.uniform(kw, (in_features, out_features), jnp.float32,
                           minval=-bound, maxval=bound)
    b = jax.random.uniform(kb, (1, out_features), jnp.float32,
                           minval=-bound, maxval=bound)
    return w, b


def init_qnet_params(key, num_states, num_actions, hidden=50):
    k1, k2, k3, kv, ka = jax.random.split(key, 5)
    w1, b1 = init_linear(k1, num_states, hidden)
    w2, b2 = init_linear(k2, hidden, hidden)
    w3, b3 = init_linear(k3, hidden, hidden)
    wv, bv = init_linear(kv, hidden, 1)
    wa, ba = init_linear(ka, hidden, num_actions)
    return (w1, b1, w2, b2, w3, b3, wv, bv, wa, ba)


def qnet_reference_f32(x, params):
    """Plain-JAX f32 reference matching the PyTorch forward (Q = V + A)."""
    (w1, b1, w2, b2, w3, b3, wv, bv, wa, ba) = params
    h = jnp.maximum(x @ w1 + b1, 0.0)
    h = jnp.maximum(h @ w2 + b2, 0.0)
    h = jnp.maximum(h @ w3 + b3, 0.0)
    return (h @ wv + bv) + (h @ wa + ba)


def qnet_reference_bf16(x, params):
    """Reference matching the kernel's exact numerics: bf16 operands, f32
    accumulation, fused V/A head."""
    (w1, b1, w2, b2, w3, b3, wv, bv, wa, ba) = params
    bf16 = jnp.bfloat16

    def lin(h, w, b):
        return jnp.dot(h.astype(bf16), w.astype(bf16),
                       preferred_element_type=jnp.float32) + b

    h = jnp.maximum(lin(x, w1, b1), 0.0)
    h = jnp.maximum(lin(h, w2, b2), 0.0)
    h = jnp.maximum(lin(h, w3, b3), 0.0)
    return lin(h, wa + wv, ba + bv)


def _check(q, x, params, name):
    q_match = qnet_reference_bf16(x, params)
    q_f32 = qnet_reference_f32(x, params)
    assert jnp.allclose(q, q_match, atol=2e-3, rtol=2e-3), \
        f"{name}: mismatch vs bf16-matched reference"
    assert jnp.allclose(q, q_f32, atol=7e-2, rtol=7e-2), \
        f"{name}: mismatch vs f32 reference"


if __name__ == "__main__":
    num_states = 8
    num_actions = 4

    key = jax.random.PRNGKey(0)
    k_params, k_x1, k_x2, k_x3 = jax.random.split(key, 4)
    params = init_qnet_params(k_params, num_states, num_actions)

    # Small case from the module spec: single grid step, batch padded 2 -> 8.
    x_small = jax.random.normal(k_x1, (2, num_states), jnp.float32)
    q_small = jax.block_until_ready(qnet_forward(x_small, params))
    assert q_small.shape == (2, num_actions)
    _check(q_small, x_small, params, "small")

    # Mid batch: exercises the "split into >= 2 tiles for megacore" path
    # (1500 -> 2 tiles of 752 rows, last 4 rows padded).
    x_mid = jax.random.normal(k_x2, (1500, num_states), jnp.float32)
    q_mid = jax.block_until_ready(qnet_forward(x_mid, params))
    assert q_mid.shape == (1500, num_actions)
    _check(q_mid, x_mid, params, "mid")

    # Large batch: multi-step batch grid with the default 2048-row tile
    # (5000 -> grid of 3, batch padded to 6144).
    x_big = jax.random.normal(k_x3, (5000, num_states), jnp.float32)
    q_big = jax.block_until_ready(qnet_forward(x_big, params))
    assert q_big.shape == (5000, num_actions)
    _check(q_big, x_big, params, "big")

    print("KERNEL_OK")
</pallas_src>

<mosaic_0001>
module attributes {stable_mosaic.version = 11 : i64} {
  func.func @qnet_kernel(%arg0: i32, %arg1: memref<8x16xf32, #tpu.memory_space<vmem>>, %arg2: memref<16x128xbf16, #tpu.memory_space<vmem>>, %arg3: memref<1x128xf32, #tpu.memory_space<vmem>>, %arg4: memref<128x128xbf16, #tpu.memory_space<vmem>>, %arg5: memref<1x128xf32, #tpu.memory_space<vmem>>, %arg6: memref<128x128xbf16, #tpu.memory_space<vmem>>, %arg7: memref<1x128xf32, #tpu.memory_space<vmem>>, %arg8: memref<128x128xbf16, #tpu.memory_space<vmem>>, %arg9: memref<1x128xf32, #tpu.memory_space<vmem>>, %arg10: memref<8x128xf32, #tpu.memory_space<vmem>>) attributes {dimension_semantics = [#tpu.dimension_semantics<parallel>], iteration_bounds = array<i64: 1>, scalar_prefetch = 0 : i64, scratch_operands = 0 : i64, tpu.core_type = #tpu.core_type<tc>, window_params = [{transform_indices = @transform_0, window_bounds = array<i64: 8, 16>}, {pipeline_mode = #tpu.pipeline_mode<synchronous>, transform_indices = @transform_1, window_bounds = array<i64: 16, 128>}, {pipeline_mode = #tpu.pipeline_mode<synchronous>, transform_indices = @transform_2, window_bounds = array<i64: 1, 128>}, {pipeline_mode = #tpu.pipeline_mode<synchronous>, transform_indices = @transform_3, window_bounds = array<i64: 128, 128>}, {pipeline_mode = #tpu.pipeline_mode<synchronous>, transform_indices = @transform_4, window_bounds = array<i64: 1, 128>}, {pipeline_mode = #tpu.pipeline_mode<synchronous>, transform_indices = @transform_5, window_bounds = array<i64: 128, 128>}, {pipeline_mode = #tpu.pipeline_mode<synchronous>, transform_indices = @transform_6, window_bounds = array<i64: 1, 128>}, {pipeline_mode = #tpu.pipeline_mode<synchronous>, transform_indices = @transform_7, window_bounds = array<i64: 128, 128>}, {pipeline_mode = #tpu.pipeline_mode<synchronous>, transform_indices = @transform_8, window_bounds = array<i64: 1, 128>}, {transform_indices = @transform_9, window_bounds = array<i64: 8, 128>}]} {
    %c0 = arith.constant 0 : index
    %c0_0 = arith.constant 0 : index
    %0 = vector.load %arg1[%c0, %c0_0] : memref<8x16xf32, #tpu.memory_space<vmem>>, vector<8x16xf32>
    %1 = arith.truncf %0 : vector<8x16xf32> to vector<8x16xbf16>
    %c0_1 = arith.constant 0 : index
    %c0_2 = arith.constant 0 : index
    %2 = vector.load %arg2[%c0_1, %c0_2] : memref<16x128xbf16, #tpu.memory_space<vmem>>, vector<16x128xbf16>
    %cst = arith.constant dense<0.000000e+00> : vector<8x128xf32>
    %3 = tpu.matmul %1, %2, %cst {dimension_numbers = #tpu.dot_dimension_numbers<[1], [0], [0], [1], [0, 0, 1, 1], [], []>} : vector<8x16xbf16>, vector<16x128xbf16>, vector<8x128xf32> -> vector<8x128xf32>
    %c0_3 = arith.constant 0 : index
    %c0_4 = arith.constant 0 : index
    %4 = vector.load %arg3[%c0_3, %c0_4] : memref<1x128xf32, #tpu.memory_space<vmem>>, vector<1x128xf32>
    %5 = vector.broadcast %4 : vector<1x128xf32> to vector<8x128xf32>
    %6 = arith.addf %3, %5 : vector<8x128xf32>
    %cst_5 = arith.constant 0.000000e+00 : f32
    %7 = vector.broadcast %cst_5 : f32 to vector<8x128xf32>
    %8 = arith.maximumf %6, %7 : vector<8x128xf32>
    %9 = arith.truncf %8 : vector<8x128xf32> to vector<8x128xbf16>
    %c0_6 = arith.constant 0 : index
    %c0_7 = arith.constant 0 : index
    %10 = vector.load %arg4[%c0_6, %c0_7] : memref<128x128xbf16, #tpu.memory_space<vmem>>, vector<128x128xbf16>
    %cst_8 = arith.constant dense<0.000000e+00> : vector<8x128xf32>
    %11 = tpu.matmul %9, %10, %cst_8 {dimension_numbers = #tpu.dot_dimension_numbers<[1], [0], [0], [1], [0, 0, 1, 1], [], []>} : vector<8x128xbf16>, vector<128x128xbf16>, vector<8x128xf32> -> vector<8x128xf32>
    %c0_9 = arith.constant 0 : index
    %c0_10 = arith.constant 0 : index
    %12 = vector.load %arg5[%c0_9, %c0_10] : memref<1x128xf32, #tpu.memory_space<vmem>>, vector<1x128xf32>
    %13 = vector.broadcast %12 : vector<1x128xf32> to vector<8x128xf32>
    %14 = arith.addf %11, %13 : vector<8x128xf32>
    %cst_11 = arith.constant 0.000000e+00 : f32
    %15 = vector.broadcast %cst_11 : f32 to vector<8x128xf32>
    %16 = arith.maximumf %14, %15 : vector<8x128xf32>
    %17 = arith.truncf %16 : vector<8x128xf32> to vector<8x128xbf16>
    %c0_12 = arith.constant 0 : index
    %c0_13 = arith.constant 0 : index
    %18 = vector.load %arg6[%c0_12, %c0_13] : memref<128x128xbf16, #tpu.memory_space<vmem>>, vector<128x128xbf16>
    %cst_14 = arith.constant dense<0.000000e+00> : vector<8x128xf32>
    %19 = tpu.matmul %17, %18, %cst_14 {dimension_numbers = #tpu.dot_dimension_numbers<[1], [0], [0], [1], [0, 0, 1, 1], [], []>} : vector<8x128xbf16>, vector<128x128xbf16>, vector<8x128xf32> -> vector<8x128xf32>
    %c0_15 = arith.constant 0 : index
    %c0_16 = arith.constant 0 : index
    %20 = vector.load %arg7[%c0_15, %c0_16] : memref<1x128xf32, #tpu.memory_space<vmem>>, vector<1x128xf32>
    %21 = vector.broadcast %20 : vector<1x128xf32> to vector<8x128xf32>
    %22 = arith.addf %19, %21 : vector<8x128xf32>
    %cst_17 = arith.constant 0.000000e+00 : f32
    %23 = vector.broadcast %cst_17 : f32 to vector<8x128xf32>
    %24 = arith.maximumf %22, %23 : vector<8x128xf32>
    %25 = arith.truncf %24 : vector<8x128xf32> to vector<8x128xbf16>
    %c0_18 = arith.constant 0 : index
    %c0_19 = arith.constant 0 : index
    %26 = vector.load %arg8[%c0_18, %c0_19] : memref<128x128xbf16, #tpu.memory_space<vmem>>, vector<128x128xbf16>
    %cst_20 = arith.constant dense<0.000000e+00> : vector<8x128xf32>
    %27 = tpu.matmul %25, %26, %cst_20 {dimension_numbers = #tpu.dot_dimension_numbers<[1], [0], [0], [1], [0, 0, 1, 1], [], []>} : vector<8x128xbf16>, vector<128x128xbf16>, vector<8x128xf32> -> vector<8x128xf32>
    %c0_21 = arith.constant 0 : index
    %c0_22 = arith.constant 0 : index
    %28 = vector.load %arg9[%c0_21, %c0_22] : memref<1x128xf32, #tpu.memory_space<vmem>>, vector<1x128xf32>
    %29 = vector.broadcast %28 : vector<1x128xf32> to vector<8x128xf32>
    %30 = arith.addf %27, %29 : vector<8x128xf32>
    %c0_23 = arith.constant 0 : index
    %c0_24 = arith.constant 0 : index
    %31 = vector.load %arg10[%c0_23, %c0_24] : memref<8x128xf32, #tpu.memory_space<vmem>>, vector<8x128xf32>
    tpu.vector_store %arg10[%c0_23, %c0_24], %30 {strides = array<i32>} : memref<8x128xf32, #tpu.memory_space<vmem>>, vector<8x128xf32>,
    return
  }
  func.func @transform_0(%arg0: i32) -> (i32, i32) {
    %c0_i32 = arith.constant 0 : i32
    %c0_i32_0 = arith.constant 0 : i32
    return %arg0, %c0_i32 : i32, i32
  }
  func.func @transform_1(%arg0: i32) -> (i32, i32) {
    %c0_i32 = arith.constant 0 : i32
    %c0_i32_0 = arith.constant 0 : i32
    %c0_i32_1 = arith.constant 0 : i32
    return %c0_i32, %c0_i32_0 : i32, i32
  }
  func.func @transform_2(%arg0: i32) -> (i32, i32) {
    %c0_i32 = arith.constant 0 : i32
    %c0_i32_0 = arith.constant 0 : i32
    %c0_i32_1 = arith.constant 0 : i32
    return %c0_i32, %c0_i32_0 : i32, i32
  }
  func.func @transform_3(%arg0: i32) -> (i32, i32) {
    %c0_i32 = arith.constant 0 : i32
    %c0_i32_0 = arith.constant 0 : i32
    %c0_i32_1 = arith.constant 0 : i32
    return %c0_i32, %c0_i32_0 : i32, i32
  }
  func.func @transform_4(%arg0: i32) -> (i32, i32) {
    %c0_i32 = arith.constant 0 : i32
    %c0_i32_0 = arith.constant 0 : i32
    %c0_i32_1 = arith.constant 0 : i32
    return %c0_i32, %c0_i32_0 : i32, i32
  }
  func.func @transform_5(%arg0: i32) -> (i32, i32) {
    %c0_i32 = arith.constant 0 : i32
    %c0_i32_0 = arith.constant 0 : i32
    %c0_i32_1 = arith.constant 0 : i32
    return %c0_i32, %c0_i32_0 : i32, i32
  }
  func.func @transform_6(%arg0: i32) -> (i32, i32) {
    %c0_i32 = arith.constant 0 : i32
    %c0_i32_0 = arith.constant 0 : i32
    %c0_i32_1 = arith.constant 0 : i32
    return %c0_i32, %c0_i32_0 : i32, i32
  }
  func.func @transform_7(%arg0: i32) -> (i32, i32) {
    %c0_i32 = arith.constant 0 : i32
    %c0_i32_0 = arith.constant 0 : i32
    %c0_i32_1 = arith.constant 0 : i32
    return %c0_i32, %c0_i32_0 : i32, i32
  }
  func.func @transform_8(%arg0: i32) -> (i32, i32) {
    %c0_i32 = arith.constant 0 : i32
    %c0_i32_0 = arith.constant 0 : i32
    %c0_i32_1 = arith.constant 0 : i32
    return %c0_i32, %c0_i32_0 : i32, i32
  }
  func.func @transform_9(%arg0: i32) -> (i32, i32) {
    %c0_i32 = arith.constant 0 : i32
    %c0_i32_0 = arith.constant 0 : i32
    return %arg0, %c0_i32 : i32, i32
  }
}

</mosaic_0001>

<llo_original>
// kernel: qnet_forward.1
$region0: #{qnet_forward.1}
  #allocation0 [shape = 'u32[]', space=smem, size = 0x4, offset = 0x4, fixed_abs, tag = 'smem constant byte address 0x4 - core index']
  #allocation1 [shape = 'u32[144,128]{1,0:T(1,128)}', space=vmem, size = 0x12000, scoped, tag = 'internal scratch']
  %s0 = inlined_call_operand.vmem [shape: f32[8,16], index: 0, kind: input, shape index: {}]
  %s1 = inlined_call_operand.vmem [shape: bf16[16,128], index: 1, kind: input, shape index: {}]
  %s2 = inlined_call_operand.vmem [shape: f32[1,128], index: 2, kind: input, shape index: {}]
  %s3 = inlined_call_operand.vmem [shape: bf16[128,128], index: 3, kind: input, shape index: {}]
  %s4 = inlined_call_operand.vmem [shape: f32[1,128], index: 4, kind: input, shape index: {}]
  %s5 = inlined_call_operand.vmem [shape: bf16[128,128], index: 5, kind: input, shape index: {}]
  %s6 = inlined_call_operand.vmem [shape: f32[1,128], index: 6, kind: input, shape index: {}]
  %s7 = inlined_call_operand.vmem [shape: bf16[128,128], index: 7, kind: input, shape index: {}]
  %s8 = inlined_call_operand.vmem [shape: f32[1,128], index: 8, kind: input, shape index: {}]
  %s9 = inlined_call_operand.vmem [shape: f32[8,128], index: 9, kind: output, shape index: {}]
  %s10 = sld [smem:[#allocation0]]
  $region46: #{qnet_forward.1} parent=0
    _
  %s12 = ssub.s32 1, %s10
  %s13 = scalar_select 0, %s12, %s10
  // Predicated region
  $region2: #{qnet_forward.1} parent=0 // pred_check
    _
  $region3: #{qnet_forward.1} parent=0 // pred_check_branch
    %15 = sbr.rel (0) target = $region5
  $region4: #{qnet_forward.1} parent=0 // pred_region
    _
  $region5: #{qnet_forward.1} parent=0 // pred_fallthru
    _
  // Predicated region
  $region6: #{qnet_forward.1} parent=0 // pred_check
    _
  $region7: #{qnet_forward.1} parent=0 // pred_check_branch
    %17 = sbr.rel (0) target = $region9
  $region8: #{qnet_forward.1} parent=0 // pred_region
    _
  $region9: #{qnet_forward.1} parent=0 // pred_fallthru
    _
  // Predicated region
  $region10: #{qnet_forward.1} parent=0 // pred_check
    _
  $region11: #{qnet_forward.1} parent=0 // pred_check_branch
    %19 = sbr.rel (0) target = $region13
  $region12: #{qnet_forward.1} parent=0 // pred_region
    _
  $region13: #{qnet_forward.1} parent=0 // pred_fallthru
    _
  // Predicated region
  $region14: #{qnet_forward.1} parent=0 // pred_check
    _
  $region15: #{qnet_forward.1} parent=0 // pred_check_branch
    %21 = sbr.rel (0) target = $region17
  $region16: #{qnet_forward.1} parent=0 // pred_region
    _
  $region17: #{qnet_forward.1} parent=0 // pred_fallthru
    _
  // Predicated region
  $region18: #{qnet_forward.1} parent=0 // pred_check
    _
  $region19: #{qnet_forward.1} parent=0 // pred_check_branch
    %23 = sbr.rel (0) target = $region21
  $region20: #{qnet_forward.1} parent=0 // pred_region
    _
  $region21: #{qnet_forward.1} parent=0 // pred_fallthru
    _
  // Predicated region
  $region22: #{qnet_forward.1} parent=0 // pred_check
    _
  $region23: #{qnet_forward.1} parent=0 // pred_check_branch
    %25 = sbr.rel (0) target = $region25
  $region24: #{qnet_forward.1} parent=0 // pred_region
    _
  $region25: #{qnet_forward.1} parent=0 // pred_fallthru
    _
  // Predicated region
  $region26: #{qnet_forward.1} parent=0 // pred_check
    _
  $region27: #{qnet_forward.1} parent=0 // pred_check_branch
    %27 = sbr.rel (0) target = $region29
  $region28: #{qnet_forward.1} parent=0 // pred_region
    _
  $region29: #{qnet_forward.1} parent=0 // pred_fallthru
    _
  // Predicated region
  $region30: #{qnet_forward.1} parent=0 // pred_check
    _
  $region31: #{qnet_forward.1} parent=0 // pred_check_branch
    %29 = sbr.rel (0) target = $region33
  $region32: #{qnet_forward.1} parent=0 // pred_region
    _
  $region33: #{qnet_forward.1} parent=0 // pred_fallthru
    _
  // Predicated region
  $region34: #{qnet_forward.1} parent=0 // pred_check
    _
  $region35: #{qnet_forward.1} parent=0 // pred_check_branch
    %31 = sbr.rel (0) target = $region37
  $region36: #{qnet_forward.1} parent=0 // pred_region
    _
  $region37: #{qnet_forward.1} parent=0 // pred_fallthru
    _
  %v33 = vld [vmem:[%s0] sm:$0xff]
  %v34 = vpack.c.bf16 %v33, %v33
  %v35 = vld [vmem:[%s1] sm:$0xf]
  %v36 = vld [vmem:[%s1 + $0x4] sm:$0xf]
  %v37 = vld [vmem:[%s2] sm:$0x1]
  %v39 = vlaneseq
  %v40 = vshrl.u32 %v39, 7
  %v41 = vsub.s32 0, %v40
  %v42 = vrot.slane %v37, %v41
  %v46 = vunpack.c.l.b16 %v35
  %v47 = vunpack.c.l.b16 %v36
  %v48 = vpack.c.b16 %v47, %v46
  %vm50 = vcmask 130048
  %v52 = vsel %vm50, %v34, 0
  %54 = vmatprep.subr.bf16.mxu0 0
  %55 = vmatpush1.bf16.msra.mxu0 %v48
  %56 = vmatprep.subr.bf16.mxu0 0
  %57 = vmatpush1.bf16.msra.mxu0 0
  %58 = vmatprep.subr.bf16.mxu0 0
  %59 = vmatpush1.bf16.msra.mxu0 0
  %60 = vmatprep.subr.bf16.mxu0 0
  %61 = vmatpush1.bf16.msra.mxu0 0
  %62 = vmatprep.subr.bf16.mxu0 0
  %63 = vmatpush1.bf16.msra.mxu0 0
  %64 = vmatprep.subr.bf16.mxu0 0
  %65 = vmatpush1.bf16.msra.mxu0 0
  %66 = vmatprep.subr.bf16.mxu0 0
  %67 = vmatpush1.bf16.msra.mxu0 0
  %68 = vmatprep.subr.bf16.mxu0 0
  %69 = vmatpush1.bf16.msra.mxu0 0
  %70 = vmatprep.subr.bf16.mxu0 0
  %71 = vmatpush1.bf16.msra.mxu0 0
  %72 = vmatprep.subr.bf16.mxu0 0
  %73 = vmatpush1.bf16.msra.mxu0 0
  %74 = vmatprep.subr.bf16.mxu0 0
  %75 = vmatpush1.bf16.msra.mxu0 0
  %76 = vmatprep.subr.bf16.mxu0 0
  %77 = vmatpush1.bf16.msra.mxu0 0
  %78 = vmatprep.subr.bf16.mxu0 0
  %79 = vmatpush1.bf16.msra.mxu0 0
  %80 = vmatprep.subr.bf16.mxu0 0
  %81 = vmatpush1.bf16.msra.mxu0 0
  %82 = vmatprep.subr.bf16.mxu0 0
  %83 = vmatpush1.bf16.msra.mxu0 0
  %84 = vmatprep.subr.bf16.mxu0 0
  %85 = vmatpush1.bf16.msra.mxu0 0
  %86 = vmatprep.mubr.bf16.mxu0 0
  %87 = vmatmul.mubr.bf16.gmra.mrb[0].mxu0 %v52
  %v88 = vpop.f32.mrb[0].mxu0
  %v89 = vadd.f32 %v42, %v88
  %v90 = vpop.f32.mrb[0].mxu0
  %v91 = vpop.f32.mrb[0].mxu0
  %v92 = vpop.f32.mrb[0].mxu0
  %93 = vdwg.mxu0
  %v94 = vmax.f32 %v89, 0.0
  %v95 = vpack.c.bf16 %v94, %v94
  %v96 = vld [vmem:[%s3] sm:$0xf]
  %v97 = vld [vmem:[%s3 + $0x4] sm:$0xf]
  %v98 = vld [vmem:[%s3 + $0x8] sm:$0xf]
  %v99 = vld [vmem:[%s3 + $0xc] sm:$0xf]
  %v100 = vld [vmem:[%s3 + $0x10] sm:$0xf]
  %v101 = vld [vmem:[%s3 + $0x14] sm:$0xf]
  %v102 = vld [vmem:[%s3 + $0x18] sm:$0xf]
  %v103 = vld [vmem:[%s3 + $0x1c] sm:$0xf]
  %v104 = vld [vmem:[%s3 + $0x20] sm:$0xf]
  %v105 = vld [vmem:[%s3 + $0x24] sm:$0xf]
  %v106 = vld [vmem:[%s3 + $0x28] sm:$0xf]
  %v107 = vld [vmem:[%s3 + $0x2c] sm:$0xf]
  %v108 = vld [vmem:[%s3 + $0x30] sm:$0xf]
  %v109 = vld [vmem:[%s3 + $0x34] sm:$0xf]
  %v110 = vld [vmem:[%s3 + $0x38] sm:$0xf]
  %v111 = vld [vmem:[%s3 + $0x3c] sm:$0xf]
  %v112 = vld [vmem:[%s4] sm:$0x1]
  %v114 = vlaneseq
  %v115 = vshrl.u32 %v114, 7
  %v116 = vsub.s32 0, %v115
  %v117 = vrot.slane %v112, %v116
  %v135 = vunpack.c.l.b16 %v96
  %v136 = vunpack.c.l.b16 %v97
  %v137 = vunpack.c.l.b16 %v98
  %v138 = vunpack.c.l.b16 %v99
  %v139 = vunpack.c.l.b16 %v100
  %v140 = vunpack.c.l.b16 %v101
  %v141 = vunpack.c.l.b16 %v102
  %v142 = vunpack.c.l.b16 %v103
  %v143 = vunpack.c.l.b16 %v104
  %v144 = vunpack.c.l.b16 %v105
  %v145 = vunpack.c.l.b16 %v106
  %v146 = vunpack.c.l.b16 %v107
  %v147 = vunpack.c.l.b16 %v108
  %v148 = vunpack.c.l.b16 %v109
  %v149 = vunpack.c.l.b16 %v110
  %v150 = vunpack.c.l.b16 %v111
  %v151 = vpack.c.b16 %v136, %v135
  %v152 = vpack.c.b16 %v138, %v137
  %v153 = vpack.c.b16 %v140, %v139
  %v154 = vpack.c.b16 %v142, %v141
  %v155 = vpack.c.b16 %v144, %v143
  %v156 = vpack.c.b16 %v146, %v145
  %v157 = vpack.c.b16 %v148, %v147
  %v158 = vpack.c.b16 %v150, %v149
  %167 = vmatprep.subr.bf16.mxu0 0
  %168 = vmatpush1.bf16.msra.mxu0 %v151
  %169 = vmatprep.subr.bf16.mxu0 0
  %170 = vmatpush1.bf16.msra.mxu0 %v152
  %171 = vmatprep.subr.bf16.mxu0 0
  %172 = vmatpush1.bf16.msra.mxu0 %v153
  %173 = vmatprep.subr.bf16.mxu0 0
  %174 = vmatpush1.bf16.msra.mxu0 %v154
  %175 = vmatprep.subr.bf16.mxu0 0
  %176 = vmatpush1.bf16.msra.mxu0 %v155
  %177 = vmatprep.subr.bf16.mxu0 0
  %178 = vmatpush1.bf16.msra.mxu0 %v156
  %179 = vmatprep.subr.bf16.mxu0 0
  %180 = vmatpush1.bf16.msra.mxu0 %v157
  %181 = vmatprep.subr.bf16.mxu0 0
  %182 = vmatpush1.bf16.msra.mxu0 %v158
  %183 = vmatprep.subr.bf16.mxu0 0
  %184 = vmatpush1.bf16.msra.mxu0 0
  %185 = vmatprep.subr.bf16.mxu0 0
  %186 = vmatpush1.bf16.msra.mxu0 0
  %187 = vmatprep.subr.bf16.mxu0 0
  %188 = vmatpush1.bf16.msra.mxu0 0
  %189 = vmatprep.subr.bf16.mxu0 0
  %190 = vmatpush1.bf16.msra.mxu0 0
  %191 = vmatprep.subr.bf16.mxu0 0
  %192 = vmatpush1.bf16.msra.mxu0 0
  %193 = vmatprep.subr.bf16.mxu0 0
  %194 = vmatpush1.bf16.msra.mxu0 0
  %195 = vmatprep.subr.bf16.mxu0 0
  %196 = vmatpush1.bf16.msra.mxu0 0
  %197 = vmatprep.subr.bf16.mxu0 0
  %198 = vmatpush1.bf16.msra.mxu0 0
  %199 = vmatprep.mubr.bf16.mxu0 0
  %200 = vmatmul.mubr.bf16.gmra.mrb[0].mxu0 %v95
  %v201 = vpop.f32.mrb[0].mxu0
  %v202 = vadd.f32 %v117, %v201
  %v203 = vpop.f32.mrb[0].mxu0
  %v204 = vpop.f32.mrb[0].mxu0
  %v205 = vpop.f32.mrb[0].mxu0
  %206 = vdwg.mxu0
  %v207 = vmax.f32 %v202, 0.0
  %v208 = vpack.c.bf16 %v207, %v207
  %v209 = vld [vmem:[%s5] sm:$0xf]
  %v210 = vld [vmem:[%s5 + $0x4] sm:$0xf]
  %v211 = vld [vmem:[%s5 + $0x8] sm:$0xf]
  %v212 = vld [vmem:[%s5 + $0xc] sm:$0xf]
  %v213 = vld [vmem:[%s5 + $0x10] sm:$0xf]
  %v214 = vld [vmem:[%s5 + $0x14] sm:$0xf]
  %v215 = vld [vmem:[%s5 + $0x18] sm:$0xf]
  %v216 = vld [vmem:[%s5 + $0x1c] sm:$0xf]
  %v217 = vld [vmem:[%s5 + $0x20] sm:$0xf]
  %v218 = vld [vmem:[%s5 + $0x24] sm:$0xf]
  %v219 = vld [vmem:[%s5 + $0x28] sm:$0xf]
  %v220 = vld [vmem:[%s5 + $0x2c] sm:$0xf]
  %v221 = vld [vmem:[%s5 + $0x30] sm:$0xf]
  %v222 = vld [vmem:[%s5 + $0x34] sm:$0xf]
  %v223 = vld [vmem:[%s5 + $0x38] sm:$0xf]
  %v224 = vld [vmem:[%s5 + $0x3c] sm:$0xf]
  %v225 = vld [vmem:[%s6] sm:$0x1]
  %v227 = vlaneseq
  %v228 = vshrl.u32 %v227, 7
  %v229 = vsub.s32 0, %v228
  %v230 = vrot.slane %v225, %v229
  %v248 = vunpack.c.l.b16 %v209
  %v249 = vunpack.c.l.b16 %v210
  %v250 = vunpack.c.l.b16 %v211
  %v251 = vunpack.c.l.b16 %v212
  %v252 = vunpack.c.l.b16 %v213
  %v253 = vunpack.c.l.b16 %v214
  %v254 = vunpack.c.l.b16 %v215
  %v255 = vunpack.c.l.b16 %v216
  %v256 = vunpack.c.l.b16 %v217
  %v257 = vunpack.c.l.b16 %v218
  %v258 = vunpack.c.l.b16 %v219
  %v259 = vunpack.c.l.b16 %v220
  %v260 = vunpack.c.l.b16 %v221
  %v261 = vunpack.c.l.b16 %v222
  %v262 = vunpack.c.l.b16 %v223
  %v263 = vunpack.c.l.b16 %v224
  %v264 = vpack.c.b16 %v249, %v248
  %v265 = vpack.c.b16 %v251, %v250
  %v266 = vpack.c.b16 %v253, %v252
  %v267 = vpack.c.b16 %v255, %v254
  %v268 = vpack.c.b16 %v257, %v256
  %v269 = vpack.c.b16 %v259, %v258
  %v270 = vpack.c.b16 %v261, %v260
  %v271 = vpack.c.b16 %v263, %v262
  %280 = vmatprep.subr.bf16.mxu0 0
  %281 = vmatpush1.bf16.msra.mxu0 %v264
  %282 = vmatprep.subr.bf16.mxu0 0
  %283 = vmatpush1.bf16.msra.mxu0 %v265
  %284 = vmatprep.subr.bf16.mxu0 0
  %285 = vmatpush1.bf16.msra.mxu0 %v266
  %286 = vmatprep.subr.bf16.mxu0 0
  %287 = vmatpush1.bf16.msra.mxu0 %v267
  %288 = vmatprep.subr.bf16.mxu0 0
  %289 = vmatpush1.bf16.msra.mxu0 %v268
  %290 = vmatprep.subr.bf16.mxu0 0
  %291 = vmatpush1.bf16.msra.mxu0 %v269
  %292 = vmatprep.subr.bf16.mxu0 0
  %293 = vmatpush1.bf16.msra.mxu0 %v270
  %294 = vmatprep.subr.bf16.mxu0 0
  %295 = vmatpush1.bf16.msra.mxu0 %v271
  %296 = vmatprep.subr.bf16.mxu0 0
  %297 = vmatpush1.bf16.msra.mxu0 0
  %298 = vmatprep.subr.bf16.mxu0 0
  %299 = vmatpush1.bf16.msra.mxu0 0
  %300 = vmatprep.subr.bf16.mxu0 0
  %301 = vmatpush1.bf16.msra.mxu0 0
  %302 = vmatprep.subr.bf16.mxu0 0
  %303 = vmatpush1.bf16.msra.mxu0 0
  %304 = vmatprep.subr.bf16.mxu0 0
  %305 = vmatpush1.bf16.msra.mxu0 0
  %306 = vmatprep.subr.bf16.mxu0 0
  %307 = vmatpush1.bf16.msra.mxu0 0
  %308 = vmatprep.subr.bf16.mxu0 0
  %309 = vmatpush1.bf16.msra.mxu0 0
  %310 = vmatprep.subr.bf16.mxu0 0
  %311 = vmatpush1.bf16.msra.mxu0 0
  %312 = vmatprep.mubr.bf16.mxu0 0
  %313 = vmatmul.mubr.bf16.gmra.mrb[0].mxu0 %v208
  %v314 = vpop.f32.mrb[0].mxu0
  %v315 = vadd.f32 %v230, %v314
  %v316 = vpop.f32.mrb[0].mxu0
  %v317 = vpop.f32.mrb[0].mxu0
  %v318 = vpop.f32.mrb[0].mxu0
  %319 = vdwg.mxu0
  %v320 = vmax.f32 %v315, 0.0
  %v321 = vpack.c.bf16 %v320, %v320
  %v322 = vld [vmem:[%s7] sm:$0xf]
  %v323 = vld [vmem:[%s7 + $0x4] sm:$0xf]
  %v324 = vld [vmem:[%s7 + $0x8] sm:$0xf]
  %v325 = vld [vmem:[%s7 + $0xc] sm:$0xf]
  %v326 = vld [vmem:[%s7 + $0x10] sm:$0xf]
  %v327 = vld [vmem:[%s7 + $0x14] sm:$0xf]
  %v328 = vld [vmem:[%s7 + $0x18] sm:$0xf]
  %v329 = vld [vmem:[%s7 + $0x1c] sm:$0xf]
  %v330 = vld [vmem:[%s7 + $0x20] sm:$0xf]
  %v331 = vld [vmem:[%s7 + $0x24] sm:$0xf]
  %v332 = vld [vmem:[%s7 + $0x28] sm:$0xf]
  %v333 = vld [vmem:[%s7 + $0x2c] sm:$0xf]
  %v334 = vld [vmem:[%s7 + $0x30] sm:$0xf]
  %v335 = vld [vmem:[%s7 + $0x34] sm:$0xf]
  %v336 = vld [vmem:[%s7 + $0x38] sm:$0xf]
  %v337 = vld [vmem:[%s7 + $0x3c] sm:$0xf]
  %v338 = vld [vmem:[%s8] sm:$0x1]
  %v340 = vlaneseq
  %v341 = vshrl.u32 %v340, 7
  %v342 = vsub.s32 0, %v341
  %v343 = vrot.slane %v338, %v342
  %v361 = vunpack.c.l.b16 %v322
  %v362 = vunpack.c.l.b16 %v323
  %v363 = vunpack.c.l.b16 %v324
  %v364 = vunpack.c.l.b16 %v325
  %v365 = vunpack.c.l.b16 %v326
  %v366 = vunpack.c.l.b16 %v327
  %v367 = vunpack.c.l.b16 %v328
  %v368 = vunpack.c.l.b16 %v329
  %v369 = vunpack.c.l.b16 %v330
  %v370 = vunpack.c.l.b16 %v331
  %v371 = vunpack.c.l.b16 %v332
  %v372 = vunpack.c.l.b16 %v333
  %v373 = vunpack.c.l.b16 %v334
  %v374 = vunpack.c.l.b16 %v335
  %v375 = vunpack.c.l.b16 %v336
  %v376 = vunpack.c.l.b16 %v337
  %v377 = vpack.c.b16 %v362, %v361
  %v378 = vpack.c.b16 %v364, %v363
  %v379 = vpack.c.b16 %v366, %v365
  %v380 = vpack.c.b16 %v368, %v367
  %v381 = vpack.c.b16 %v370, %v369
  %v382 = vpack.c.b16 %v372, %v371
  %v383 = vpack.c.b16 %v374, %v373
  %v384 = vpack.c.b16 %v376, %v375
  %393 = vmatprep.subr.bf16.mxu0 0
  %394 = vmatpush1.bf16.msra.mxu0 %v377
  %395 = vmatprep.subr.bf16.mxu0 0
  %396 = vmatpush1.bf16.msra.mxu0 %v378
  %397 = vmatprep.subr.bf16.mxu0 0
  %398 = vmatpush1.bf16.msra.mxu0 %v379
  %399 = vmatprep.subr.bf16.mxu0 0
  %400 = vmatpush1.bf16.msra.mxu0 %v380
  %401 = vmatprep.subr.bf16.mxu0 0
  %402 = vmatpush1.bf16.msra.mxu0 %v381
  %403 = vmatprep.subr.bf16.mxu0 0
  %404 = vmatpush1.bf16.msra.mxu0 %v382
  %405 = vmatprep.subr.bf16.mxu0 0
  %406 = vmatpush1.bf16.msra.mxu0 %v383
  %407 = vmatprep.subr.bf16.mxu0 0
  %408 = vmatpush1.bf16.msra.mxu0 %v384
  %409 = vmatprep.subr.bf16.mxu0 0
  %410 = vmatpush1.bf16.msra.mxu0 0
  %411 = vmatprep.subr.bf16.mxu0 0
  %412 = vmatpush1.bf16.msra.mxu0 0
  %413 = vmatprep.subr.bf16.mxu0 0
  %414 = vmatpush1.bf16.msra.mxu0 0
  %415 = vmatprep.subr.bf16.mxu0 0
  %416 = vmatpush1.bf16.msra.mxu0 0
  %417 = vmatprep.subr.bf16.mxu0 0
  %418 = vmatpush1.bf16.msra.mxu0 0
  %419 = vmatprep.subr.bf16.mxu0 0
  %420 = vmatpush1.bf16.msra.mxu0 0
  %421 = vmatprep.subr.bf16.mxu0 0
  %422 = vmatpush1.bf16.msra.mxu0 0
  %423 = vmatprep.subr.bf16.mxu0 0
  %424 = vmatpush1.bf16.msra.mxu0 0
  %425 = vmatprep.mubr.bf16.mxu0 0
  %426 = vmatmul.mubr.bf16.gmra.mrb[0].mxu0 %v321
  %v427 = vpop.f32.mrb[0].mxu0
  %v428 = vadd.f32 %v343, %v427
  %v429 = vpop.f32.mrb[0].mxu0
  %v430 = vpop.f32.mrb[0].mxu0
  %v431 = vpop.f32.mrb[0].mxu0
  %432 = vdwg.mxu0
  %433 = vst [vmem:[%s9] sm:$0xff] %v428
  // Predicated region
  $region38: #{qnet_forward.1} parent=0 // pred_check
    _
  $region39: #{qnet_forward.1} parent=0 // pred_check_branch
    %435 = sbr.rel (0) target = $region41
  $region40: #{qnet_forward.1} parent=0 // pred_region
    _
  $region41: #{qnet_forward.1} parent=0 // pred_fallthru
    _
  // Predicated region
  $region42: #{qnet_forward.1} parent=0 // pred_check
    _
  $region43: #{qnet_forward.1} parent=0 // pred_check_branch
    %437 = sbr.rel (0) target = $region45
  $region44: #{qnet_forward.1} parent=0 // pred_region
    _
  $region45: #{qnet_forward.1} parent=0 // pred_fallthru
    _

</llo_original>
